<compile_context>
chip_gen: v7x
topology: tpu7x:2x2x1
jax: 0.10.0
libtpu: 0.0.40
codegen_flags: <defaults>
</compile_context>

<pallas_src>
import jax
import jax.numpy as jnp
from jax.experimental import pallas as pl
from jax.experimental.pallas import tpu as pltpu

LANE = 128   # TPU lane width; every feature dim is zero-padded to this
SUB = 8      # f32 sublane height; batch is padded to a multiple of this


def _round_up(x, m):
    return (x + m - 1) // m * m


def _elu(v):
    # PyTorch ELU (alpha=1): x if x > 0 else exp(x) - 1.
    # One EUP transcendental per element.  exp(v) overflows to +inf for large
    # positive v but that branch is discarded by the where (no NaN).
    return jnp.where(v > 0, v, jnp.exp(v) - 1.0)


def _make_kernel(k_in):
    """Kernel factory; k_in is the (128-aligned) packed input feature width."""
    w1_off = k_in
    w2_off = k_in + LANE
    w3_off = k_in + 2 * LANE

    def decoder_kernel(x_ref, w_ref, b_ref, o_ref):
        cdt = w_ref.dtype  # bf16 compute dtype for MXU operands

        # Fused (part_proj + input_proj): single (tb, k_in) @ (k_in, 128) pass.
        h = (
            jnp.dot(x_ref[...], w_ref[0:k_in, :],
                    preferred_element_type=jnp.float32)
            + b_ref[0:1, :]
        )

        # mlp: ELU -> Linear -> ELU -> Linear -> ELU -> Linear
        h = _elu(h)
        h = (jnp.dot(h.astype(cdt), w_ref[w1_off:w1_off + LANE, :],
                     preferred_element_type=jnp.float32) + b_ref[1:2, :])
        h = _elu(h)
        h = (jnp.dot(h.astype(cdt), w_ref[w2_off:w2_off + LANE, :],
                     preferred_element_type=jnp.float32) + b_ref[2:3, :])
        h = _elu(h)
        o_ref[...] = (jnp.dot(h.astype(cdt), w_ref[w3_off:w3_off + LANE, :],
                              preferred_element_type=jnp.float32)
                      + b_ref[3:4, :])

    return decoder_kernel


def init_params(key, out_dim, partial_dim, latent_dim, h_dim):
    """Raw f32 parameters in (in_features, out_features) layout: y = x @ W + b."""
    ks = jax.random.split(key, 5)

    def lin(k, fan_in, fan_out):
        kw, kb = jax.random.split(k)
        bound = 1.0 / jnp.sqrt(jnp.float32(fan_in))
        w = jax.random.uniform(kw, (fan_in, fan_out), jnp.float32, -bound, bound)
        b = jax.random.uniform(kb, (fan_out,), jnp.float32, -bound, bound)
        return w, b

    w_part, b_part = lin(ks[0], partial_dim, latent_dim)
    w_in, b_in = lin(ks[1], 2 * latent_dim, h_dim)
    w1, b1 = lin(ks[2], h_dim, h_dim)
    w2, b2 = lin(ks[3], h_dim, h_dim // 2)
    w3, b3 = lin(ks[4], h_dim // 2, out_dim)
    return {
        "w_part": w_part, "b_part": b_part,
        "w_in": w_in, "b_in": b_in,
        "w1": w1, "b1": b1,
        "w2": w2, "b2": b2,
        "w3": w3, "b3": b3,
        "dims": (out_dim, partial_dim, latent_dim, h_dim),
    }


def pack_params(params, compute_dtype=jnp.bfloat16):
    """Fold part_proj into input_proj (f32), then pack all weights into one
    lane-aligned bf16 buffer and all biases into one (8,128) f32 buffer.

    Folded first layer on the packed input [z | partial_flat]:
        x @ W_fold + b_fold
    with W_fold = [ W_in[:latent] ; W_part @ W_in[latent:] ]
    and  b_fold = b_part @ W_in[latent:] + b_in .
    Zero padding keeps the math exact (padded lanes stay zero end-to-end)."""
    out_dim, partial_dim, latent_dim, h_dim = params["dims"]
    assert h_dim <= LANE and h_dim // 2 <= LANE and out_dim <= LANE, (
        "hidden/output dims must fit in one 128-lane block")

    k_in = _round_up(latent_dim + partial_dim, LANE)
    w_rows = k_in + 3 * LANE

    w_in_top = params["w_in"][:latent_dim]           # (latent, h)
    w_in_bot = params["w_in"][latent_dim:]           # (latent, h)
    w_fold_partial = params["w_part"] @ w_in_bot     # (partial, h), f32
    b_fold = params["b_part"] @ w_in_bot + params["b_in"]

    w = jnp.zeros((w_rows, LANE), jnp.float32)
    w = w.at[0:latent_dim, :h_dim].set(w_in_top)
    w = w.at[latent_dim:latent_dim + partial_dim, :h_dim].set(w_fold_partial)
    w = w.at[k_in:k_in + h_dim, :h_dim].set(params["w1"])
    w = w.at[k_in + LANE:k_in + LANE + h_dim, :h_dim // 2].set(params["w2"])
    w = w.at[k_in + 2 * LANE:k_in + 2 * LANE + h_dim // 2, :out_dim].set(
        params["w3"])

    b = jnp.zeros((SUB, LANE), jnp.float32)
    b = b.at[0, :h_dim].set(b_fold)
    b = b.at[1, :h_dim].set(params["b1"])
    b = b.at[2, :h_dim // 2].set(params["b2"])
    b = b.at[3, :out_dim].set(params["b3"])

    return {"w": w.astype(compute_dtype), "b": b,
            "dims": params["dims"], "k_in": k_in}


def _choose_tile(B):
    """Batch tile: multiple of 8, up to 512 rows, but kept small enough that
    the grid has >= 2 parallel steps when B allows it (v7x has 2 TCs)."""
    tb = min(512, _round_up(max(B, SUB), SUB))
    if B > SUB:
        tb = min(tb, _round_up((B + 1) // 2, SUB))
    return tb


def decoder_forward(z, current_partial_pose, packed):
    out_dim, partial_dim, latent_dim, h_dim = packed["dims"]
    k_in = packed["k_in"]
    w_rows = k_in + 3 * LANE
    B = z.shape[0]
    partial_flat = current_partial_pose.reshape(B, -1)

    tb = _choose_tile(B)
    b_pad = _round_up(B, tb)
    grid = (b_pad // tb,)

    # Single lane-dense bf16 input: [z | partial_flat], zero padded.  This is
    # the dtype the kernel fed the MXU anyway, so numerics are unchanged while
    # input HBM traffic drops ~4x vs two padded f32 arrays.
    cdt = packed["w"].dtype
    x = jnp.zeros((b_pad, k_in), cdt)
    x = x.at[:B, :latent_dim].set(z.astype(cdt))
    x = x.at[:B, latent_dim:latent_dim + partial_dim].set(
        partial_flat.astype(cdt))

    flops = 2 * b_pad * LANE * (k_in + 3 * LANE)
    transcendentals = 3 * b_pad * LANE
    bytes_accessed = (b_pad * k_in * 2          # bf16 input
                      + b_pad * LANE * 4        # f32 output
                      + w_rows * LANE * 2       # bf16 packed weights
                      + SUB * LANE * 4)         # f32 packed biases

    out = pl.pallas_call(
        _make_kernel(k_in),
        out_shape=jax.ShapeDtypeStruct((b_pad, LANE), jnp.float32),
        grid_spec=pltpu.PrefetchScalarGridSpec(
            num_scalar_prefetch=0,
            grid=grid,
            in_specs=[
                pl.BlockSpec((tb, k_in), lambda i: (i, 0)),       # packed input
                pl.BlockSpec((w_rows, LANE), lambda i: (0, 0)),   # packed W (resident)
                pl.BlockSpec((SUB, LANE), lambda i: (0, 0)),      # packed b (resident)
            ],
            out_specs=pl.BlockSpec((tb, LANE), lambda i: (i, 0)),
        ),
        compiler_params=pltpu.CompilerParams(
            dimension_semantics=("parallel",),   # batch tiles -> both TCs on v7x
        ),
        cost_estimate=pl.CostEstimate(
            flops=flops,
            transcendentals=transcendentals,
            bytes_accessed=bytes_accessed,
        ),
    )(x, packed["w"], packed["b"])

    return out[:B, :out_dim]


def decoder_reference_exact(z, current_partial_pose, params):
    """Exact f32 math mirroring the PyTorch module (no fold, no bf16)."""
    B = z.shape[0]
    pf = current_partial_pose.reshape(B, -1)
    penc = pf @ params["w_part"] + params["b_part"]
    x = jnp.concatenate([z, penc], axis=-1)
    x = x @ params["w_in"] + params["b_in"]
    h = _elu(x)
    h = h @ params["w1"] + params["b1"]
    h = _elu(h)
    h = h @ params["w2"] + params["b2"]
    h = _elu(h)
    return h @ params["w3"] + params["b3"]


def decoder_reference_packed(z, current_partial_pose, packed):
    """Pure-JAX replay of the kernel's folded bf16/f32-accum math (tight ref)."""
    out_dim, partial_dim, latent_dim, h_dim = packed["dims"]
    k_in = packed["k_in"]
    w, b = packed["w"], packed["b"]
    cdt = w.dtype
    B = z.shape[0]
    pf = current_partial_pose.reshape(B, -1)

    x = jnp.zeros((B, k_in), cdt)
    x = x.at[:, :latent_dim].set(z.astype(cdt))
    x = x.at[:, latent_dim:latent_dim + partial_dim].set(pf.astype(cdt))

    h = jnp.dot(x, w[0:k_in], preferred_element_type=jnp.float32) + b[0:1]
    h = _elu(h)
    h = jnp.dot(h.astype(cdt), w[k_in:k_in + LANE],
                preferred_element_type=jnp.float32) + b[1:2]
    h = _elu(h)
    h = jnp.dot(h.astype(cdt), w[k_in + LANE:k_in + 2 * LANE],
                preferred_element_type=jnp.float32) + b[2:3]
    h = _elu(h)
    out = jnp.dot(h.astype(cdt), w[k_in + 2 * LANE:k_in + 3 * LANE],
                  preferred_element_type=jnp.float32) + b[3:4]
    return out[:, :out_dim]


if __name__ == "__main__":
    # Small shapes consistent with the forward pass.
    B = 2
    out_dim = 16
    latent_dim = 32
    h_dim = 64
    pose_shape = (B, 8, 4)                     # -> partial_dim = 32
    partial_dim = pose_shape[1] * pose_shape[2]

    key = jax.random.PRNGKey(0)
    k_z, k_p, k_params, k_big = jax.random.split(key, 4)

    z = jax.random.normal(k_z, (B, latent_dim), jnp.float32)
    pose = jax.random.normal(k_p, pose_shape, jnp.float32)

    params = init_params(k_params, out_dim, partial_dim, latent_dim, h_dim)
    packed = pack_params(params, compute_dtype=jnp.bfloat16)

    out = decoder_forward(z, pose, packed)
    out = jax.block_until_ready(out)
    assert out.shape == (B, out_dim), out.shape

    # Tight check vs. a pure-JAX replay of the exact same folded bf16 math.
    ref_pk = decoder_reference_packed(z, pose, packed)
    assert jnp.allclose(out, ref_pk, atol=2e-3, rtol=2e-3), float(
        jnp.max(jnp.abs(out - ref_pk)))

    # Loose sanity check vs. exact f32 PyTorch-equivalent math (only bf16
    # operand rounding + the f32 weight fold differ).
    ref_f32 = decoder_reference_exact(z, pose, params)
    assert jnp.allclose(out, ref_f32, atol=5e-2, rtol=5e-2), float(
        jnp.max(jnp.abs(out - ref_f32)))

    # Exercise the multi-tile parallel grid path with a non-trivial batch.
    B_big = 300
    kz2, kp2 = jax.random.split(k_big)
    z_big = jax.random.normal(kz2, (B_big, latent_dim), jnp.float32)
    pose_big = jax.random.normal(kp2, (B_big,) + pose_shape[1:], jnp.float32)
    out_big = jax.block_until_ready(decoder_forward(z_big, pose_big, packed))
    ref_big = decoder_reference_packed(z_big, pose_big, packed)
    assert out_big.shape == (B_big, out_dim)
    assert jnp.allclose(out_big, ref_big, atol=2e-3, rtol=2e-3), float(
        jnp.max(jnp.abs(out_big - ref_big)))

    print("KERNEL_OK")
</pallas_src>

<mosaic_0001>
module attributes {stable_mosaic.version = 11 : i64} {
  func.func @decoder_kernel(%arg0: i32, %arg1: memref<8x128xbf16, #tpu.memory_space<vmem>>, %arg2: memref<512x128xbf16, #tpu.memory_space<vmem>>, %arg3: memref<8x128xf32, #tpu.memory_space<vmem>>, %arg4: memref<8x128xf32, #tpu.memory_space<vmem>>) attributes {dimension_semantics = [#tpu.dimension_semantics<parallel>], iteration_bounds = array<i64: 1>, scalar_prefetch = 0 : i64, scratch_operands = 0 : i64, tpu.core_type = #tpu.core_type<tc>, window_params = [{transform_indices = @transform_0, window_bounds = array<i64: 8, 128>}, {pipeline_mode = #tpu.pipeline_mode<synchronous>, transform_indices = @transform_1, window_bounds = array<i64: 512, 128>}, {pipeline_mode = #tpu.pipeline_mode<synchronous>, transform_indices = @transform_2, window_bounds = array<i64: 8, 128>}, {transform_indices = @transform_3, window_bounds = array<i64: 8, 128>}]} {
    %c0 = arith.constant 0 : index
    %c0_0 = arith.constant 0 : index
    %0 = vector.load %arg1[%c0, %c0_0] : memref<8x128xbf16, #tpu.memory_space<vmem>>, vector<8x128xbf16>
    %c0_1 = arith.constant 0 : index
    %c0_2 = arith.constant 0 : index
    %1 = vector.load %arg2[%c0_1, %c0_2] : memref<512x128xbf16, #tpu.memory_space<vmem>>, vector<128x128xbf16>
    %cst = arith.constant dense<0.000000e+00> : vector<8x128xf32>
    %2 = tpu.matmul %0, %1, %cst {dimension_numbers = #tpu.dot_dimension_numbers<[1], [0], [0], [1], [0, 0, 1, 1], [], []>} : vector<8x128xbf16>, vector<128x128xbf16>, vector<8x128xf32> -> vector<8x128xf32>
    %c0_3 = arith.constant 0 : index
    %c0_4 = arith.constant 0 : index
    %3 = vector.load %arg3[%c0_3, %c0_4] : memref<8x128xf32, #tpu.memory_space<vmem>>, vector<1x128xf32>
    %4 = vector.broadcast %3 : vector<1x128xf32> to vector<8x128xf32>
    %5 = arith.addf %2, %4 : vector<8x128xf32>
    %cst_5 = arith.constant 0.000000e+00 : f32
    %6 = vector.broadcast %cst_5 : f32 to vector<8x128xf32>
    %7 = arith.cmpf ogt, %5, %6 : vector<8x128xf32>
    %8 = math.exp %5 : vector<8x128xf32>
    %cst_6 = arith.constant 1.000000e+00 : f32
    %9 = vector.broadcast %cst_6 : f32 to vector<8x128xf32>
    %10 = arith.subf %8, %9 : vector<8x128xf32>
    %11 = arith.select %7, %5, %10 : vector<8x128xi1>, vector<8x128xf32>
    %12 = arith.truncf %11 : vector<8x128xf32> to vector<8x128xbf16>
    %c128 = arith.constant 128 : index
    %c0_7 = arith.constant 0 : index
    %13 = vector.load %arg2[%c128, %c0_7] : memref<512x128xbf16, #tpu.memory_space<vmem>>, vector<128x128xbf16>
    %cst_8 = arith.constant dense<0.000000e+00> : vector<8x128xf32>
    %14 = tpu.matmul %12, %13, %cst_8 {dimension_numbers = #tpu.dot_dimension_numbers<[1], [0], [0], [1], [0, 0, 1, 1], [], []>} : vector<8x128xbf16>, vector<128x128xbf16>, vector<8x128xf32> -> vector<8x128xf32>
    %c1 = arith.constant 1 : index
    %c0_9 = arith.constant 0 : index
    %15 = vector.load %arg3[%c1, %c0_9] : memref<8x128xf32, #tpu.memory_space<vmem>>, vector<1x128xf32>
    %16 = vector.broadcast %15 : vector<1x128xf32> to vector<8x128xf32>
    %17 = arith.addf %14, %16 : vector<8x128xf32>
    %cst_10 = arith.constant 0.000000e+00 : f32
    %18 = vector.broadcast %cst_10 : f32 to vector<8x128xf32>
    %19 = arith.cmpf ogt, %17, %18 : vector<8x128xf32>
    %20 = math.exp %17 : vector<8x128xf32>
    %cst_11 = arith.constant 1.000000e+00 : f32
    %21 = vector.broadcast %cst_11 : f32 to vector<8x128xf32>
    %22 = arith.subf %20, %21 : vector<8x128xf32>
    %23 = arith.select %19, %17, %22 : vector<8x128xi1>, vector<8x128xf32>
    %24 = arith.truncf %23 : vector<8x128xf32> to vector<8x128xbf16>
    %c256 = arith.constant 256 : index
    %c0_12 = arith.constant 0 : index
    %25 = vector.load %arg2[%c256, %c0_12] : memref<512x128xbf16, #tpu.memory_space<vmem>>, vector<128x128xbf16>
    %cst_13 = arith.constant dense<0.000000e+00> : vector<8x128xf32>
    %26 = tpu.matmul %24, %25, %cst_13 {dimension_numbers = #tpu.dot_dimension_numbers<[1], [0], [0], [1], [0, 0, 1, 1], [], []>} : vector<8x128xbf16>, vector<128x128xbf16>, vector<8x128xf32> -> vector<8x128xf32>
    %c2 = arith.constant 2 : index
    %c0_14 = arith.constant 0 : index
    %27 = vector.load %arg3[%c2, %c0_14] : memref<8x128xf32, #tpu.memory_space<vmem>>, vector<1x128xf32>
    %28 = vector.broadcast %27 : vector<1x128xf32> to vector<8x128xf32>
    %29 = arith.addf %26, %28 : vector<8x128xf32>
    %cst_15 = arith.constant 0.000000e+00 : f32
    %30 = vector.broadcast %cst_15 : f32 to vector<8x128xf32>
    %31 = arith.cmpf ogt, %29, %30 : vector<8x128xf32>
    %32 = math.exp %29 : vector<8x128xf32>
    %cst_16 = arith.constant 1.000000e+00 : f32
    %33 = vector.broadcast %cst_16 : f32 to vector<8x128xf32>
    %34 = arith.subf %32, %33 : vector<8x128xf32>
    %35 = arith.select %31, %29, %34 : vector<8x128xi1>, vector<8x128xf32>
    %36 = arith.truncf %35 : vector<8x128xf32> to vector<8x128xbf16>
    %c384 = arith.constant 384 : index
    %c0_17 = arith.constant 0 : index
    %37 = vector.load %arg2[%c384, %c0_17] : memref<512x128xbf16, #tpu.memory_space<vmem>>, vector<128x128xbf16>
    %cst_18 = arith.constant dense<0.000000e+00> : vector<8x128xf32>
    %38 = tpu.matmul %36, %37, %cst_18 {dimension_numbers = #tpu.dot_dimension_numbers<[1], [0], [0], [1], [0, 0, 1, 1], [], []>} : vector<8x128xbf16>, vector<128x128xbf16>, vector<8x128xf32> -> vector<8x128xf32>
    %c3 = arith.constant 3 : index
    %c0_19 = arith.constant 0 : index
    %39 = vector.load %arg3[%c3, %c0_19] : memref<8x128xf32, #tpu.memory_space<vmem>>, vector<1x128xf32>
    %40 = vector.broadcast %39 : vector<1x128xf32> to vector<8x128xf32>
    %41 = arith.addf %38, %40 : vector<8x128xf32>
    %c0_20 = arith.constant 0 : index
    %c0_21 = arith.constant 0 : index
    %42 = vector.load %arg4[%c0_20, %c0_21] : memref<8x128xf32, #tpu.memory_space<vmem>>, vector<8x128xf32>
    tpu.vector_store %arg4[%c0_20, %c0_21], %41 {strides = array<i32>} : memref<8x128xf32, #tpu.memory_space<vmem>>, vector<8x128xf32>,
    return
  }
  func.func @transform_0(%arg0: i32) -> (i32, i32) {
    %c0_i32 = arith.constant 0 : i32
    %c0_i32_0 = arith.constant 0 : i32
    return %arg0, %c0_i32 : i32, i32
  }
  func.func @transform_1(%arg0: i32) -> (i32, i32) {
    %c0_i32 = arith.constant 0 : i32
    %c0_i32_0 = arith.constant 0 : i32
    %c0_i32_1 = arith.constant 0 : i32
    return %c0_i32, %c0_i32_0 : i32, i32
  }
  func.func @transform_2(%arg0: i32) -> (i32, i32) {
    %c0_i32 = arith.constant 0 : i32
    %c0_i32_0 = arith.constant 0 : i32
    %c0_i32_1 = arith.constant 0 : i32
    return %c0_i32, %c0_i32_0 : i32, i32
  }
  func.func @transform_3(%arg0: i32) -> (i32, i32) {
    %c0_i32 = arith.constant 0 : i32
    %c0_i32_0 = arith.constant 0 : i32
    return %arg0, %c0_i32 : i32, i32
  }
}

</mosaic_0001>

<llo_original>
// kernel: tpu_custom_call.1
$region0: #{tpu_custom_call.1}
  #allocation0 [shape = 'u32[]', space=smem, size = 0x4, offset = 0x4, fixed_abs, tag = 'smem constant byte address 0x4 - core index']
  #allocation1 [shape = 'u32[144,128]{1,0:T(1,128)}', space=vmem, size = 0x12000, scoped, tag = 'internal scratch']
  %s0 = inlined_call_operand.hbm [shape: bf16[8,128], index: 0, kind: input, shape index: {}]
  %s1 = inlined_call_operand.hbm [shape: bf16[512,128], index: 1, kind: input, shape index: {}]
  %s2 = inlined_call_operand.hbm [shape: f32[8,128], index: 2, kind: input, shape index: {}]
  %s3 = inlined_call_operand.hbm [shape: f32[8,128], index: 3, kind: output, shape index: {}]
  %s4 = sld [smem:[#allocation0]]
  $region34: #{tpu_custom_call.1} parent=0
    _
  %s6 = ssub.s32 1, %s4
  %s7 = scalar_select 0, %s6, %s4
  $region1: #{tpu_custom_call.1} parent=0
    #allocation2 [shape = 'u8[2048]{0}', space=vmem, size = 0x800, scoped, tag = 'input window, operand 0, single buffered']
    #allocation3 [shape = 's32[1]{0}', space=sflag, size = 0x4, scoped, tag = 'scoped memory for tpu_custom_call.1']
    #allocation4 [shape = 's32[1]{0}', space=sflag, size = 0x4, scoped, tag = 'scoped memory for tpu_custom_call.1']
    #allocation5 [shape = 'u8[131072]{0}', space=vmem, size = 0x20000, scoped, tag = 'input window, operand 1, single buffered']
    #allocation6 [shape = 's32[1]{0}', space=sflag, size = 0x4, scoped, tag = 'scoped memory for tpu_custom_call.1']
    #allocation7 [shape = 'u8[4096]{0}', space=vmem, size = 0x1000, scoped, tag = 'input window, operand 2, single buffered']
    #allocation8 [shape = 'u8[4096]{0}', space=vmem, size = 0x1000, scoped, tag = 'output window, operand 0, single buffered']
    %8 = vsyncpa [#allocation3], 0
    %9 = vsyncpa [#allocation6], 0
    %10 = vsyncpa [#allocation4], 0
    // Predicated region
    $region2: #{tpu_custom_call.1} parent=1 // pred_check
      _
    $region3: #{tpu_custom_call.1} parent=1 // pred_check_branch
      %12 = sbr.rel (0) target = $region5
    $region4: #{tpu_custom_call.1} parent=1 // pred_region
      %s14 = ssub.s32 64, 64
      %15 = vsyncadd [#allocation3], %s14
      %s17 = sshll.u32 [#allocation2], 4
      %s18 = int_to_ptr.vmem [resolvable:$true] %s17
      %20 = dma.hbm_to_vmem [thread:$0]  %s0, 64, %s18, [#allocation3]
    $region5: #{tpu_custom_call.1} parent=1 // pred_fallthru
      _
    // Predicated region
    $region6: #{tpu_custom_call.1} parent=1 // pred_check
      _
    $region7: #{tpu_custom_call.1} parent=1 // pred_check_branch
      %22 = sbr.rel (0) target = $region9
    $region8: #{tpu_custom_call.1} parent=1 // pred_region
      %s24 = ssub.s32 4096, 4096
      %25 = vsyncadd [#allocation6], %s24
      %s26 = sshll.u32 [#allocation5], 4
      %s27 = int_to_ptr.vmem [resolvable:$true] %s26
      %32 = dma.hbm_to_vmem [thread:$0]  %s1, 4096, %s27, [#allocation6], 64, 64, 4
    $region9: #{tpu_custom_call.1} parent=1 // pred_fallthru
      _
    // Predicated region
    $region10: #{tpu_custom_call.1} parent=1 // pred_check
      _
    $region11: #{tpu_custom_call.1} parent=1 // pred_check_branch
      %34 = sbr.rel (0) target = $region13
    $region12: #{tpu_custom_call.1} parent=1 // pred_region
      %s36 = ssub.s32 128, 128
      %37 = vsyncadd [#allocation6], %s36
      %s39 = sshll.u32 [#allocation7], 4
      %s40 = int_to_ptr.vmem [resolvable:$true] %s39
      %42 = dma.hbm_to_vmem [thread:$0]  %s2, 128, %s40, [#allocation6]
    $region13: #{tpu_custom_call.1} parent=1 // pred_fallthru
      _
    // Predicated region
    $region14: #{tpu_custom_call.1} parent=1 // pred_check
      _
    $region15: #{tpu_custom_call.1} parent=1 // pred_check_branch
      %44 = sbr.rel (0) target = $region17
    $region16: #{tpu_custom_call.1} parent=1 // pred_region
      %45 = dma.done [#allocation3], 64
    $region17: #{tpu_custom_call.1} parent=1 // pred_fallthru
      _
    // Predicated region
    $region18: #{tpu_custom_call.1} parent=1 // pred_check
      _
    $region19: #{tpu_custom_call.1} parent=1 // pred_check_branch
      %47 = sbr.rel (0) target = $region21
    $region20: #{tpu_custom_call.1} parent=1 // pred_region
      %48 = dma.done [#allocation6], 4096
    $region21: #{tpu_custom_call.1} parent=1 // pred_fallthru
      _
    // Predicated region
    $region22: #{tpu_custom_call.1} parent=1 // pred_check
      _
    $region23: #{tpu_custom_call.1} parent=1 // pred_check_branch
      %50 = sbr.rel (0) target = $region25
    $region24: #{tpu_custom_call.1} parent=1 // pred_region
      %51 = dma.done [#allocation6], 128
    $region25: #{tpu_custom_call.1} parent=1 // pred_fallthru
      _
    %v53 = vld [vmem:[#allocation2] sm:$0xf]
    %v54 = vld [vmem:[#allocation5] sm:$0xf]
    %v55 = vld [vmem:[#allocation5 + $0x4] sm:$0xf]
    %v56 = vld [vmem:[#allocation5 + $0x8] sm:$0xf]
    %v57 = vld [vmem:[#allocation5 + $0xc] sm:$0xf]
    %v58 = vld [vmem:[#allocation5 + $0x10] sm:$0xf]
    %v59 = vld [vmem:[#allocation5 + $0x14] sm:$0xf]
    %v60 = vld [vmem:[#allocation5 + $0x18] sm:$0xf]
    %v61 = vld [vmem:[#allocation5 + $0x1c] sm:$0xf]
    %v62 = vld [vmem:[#allocation5 + $0x20] sm:$0xf]
    %v63 = vld [vmem:[#allocation5 + $0x24] sm:$0xf]
    %v64 = vld [vmem:[#allocation5 + $0x28] sm:$0xf]
    %v65 = vld [vmem:[#allocation5 + $0x2c] sm:$0xf]
    %v66 = vld [vmem:[#allocation5 + $0x30] sm:$0xf]
    %v67 = vld [vmem:[#allocation5 + $0x34] sm:$0xf]
    %v68 = vld [vmem:[#allocation5 + $0x38] sm:$0xf]
    %v69 = vld [vmem:[#allocation5 + $0x3c] sm:$0xf]
    %v70 = vld [vmem:[#allocation7] sm:$0x1]
    %v71 = vlaneseq
    %v72 = vshrl.u32 %v71, 7
    %v73 = vsub.s32 0, %v72
    %v74 = vrot.slane %v70, %v73
    %v91 = vunpack.c.l.b16 %v54
    %v92 = vunpack.c.l.b16 %v55
    %v93 = vunpack.c.l.b16 %v56
    %v94 = vunpack.c.l.b16 %v57
    %v95 = vunpack.c.l.b16 %v58
    %v96 = vunpack.c.l.b16 %v59
    %v97 = vunpack.c.l.b16 %v60
    %v98 = vunpack.c.l.b16 %v61
    %v99 = vunpack.c.l.b16 %v62
    %v100 = vunpack.c.l.b16 %v63
    %v101 = vunpack.c.l.b16 %v64
    %v102 = vunpack.c.l.b16 %v65
    %v103 = vunpack.c.l.b16 %v66
    %v104 = vunpack.c.l.b16 %v67
    %v105 = vunpack.c.l.b16 %v68
    %v106 = vunpack.c.l.b16 %v69
    %v107 = vpack.c.b16 %v92, %v91
    %v108 = vpack.c.b16 %v94, %v93
    %v109 = vpack.c.b16 %v96, %v95
    %v110 = vpack.c.b16 %v98, %v97
    %v111 = vpack.c.b16 %v100, %v99
    %v112 = vpack.c.b16 %v102, %v101
    %v113 = vpack.c.b16 %v104, %v103
    %v114 = vpack.c.b16 %v106, %v105
    %123 = vmatprep.subr.bf16.mxu0 0
    %124 = vmatpush1.bf16.msra.mxu0 %v107
    %125 = vmatprep.subr.bf16.mxu0 0
    %126 = vmatpush1.bf16.msra.mxu0 %v108
    %127 = vmatprep.subr.bf16.mxu0 0
    %128 = vmatpush1.bf16.msra.mxu0 %v109
    %129 = vmatprep.subr.bf16.mxu0 0
    %130 = vmatpush1.bf16.msra.mxu0 %v110
    %131 = vmatprep.subr.bf16.mxu0 0
    %132 = vmatpush1.bf16.msra.mxu0 %v111
    %133 = vmatprep.subr.bf16.mxu0 0
    %134 = vmatpush1.bf16.msra.mxu0 %v112
    %135 = vmatprep.subr.bf16.mxu0 0
    %136 = vmatpush1.bf16.msra.mxu0 %v113
    %137 = vmatprep.subr.bf16.mxu0 0
    %138 = vmatpush1.bf16.msra.mxu0 %v114
    %139 = vmatprep.subr.bf16.mxu0 0
    %140 = vmatpush1.bf16.msra.mxu0 0
    %141 = vmatprep.subr.bf16.mxu0 0
    %142 = vmatpush1.bf16.msra.mxu0 0
    %143 = vmatprep.subr.bf16.mxu0 0
    %144 = vmatpush1.bf16.msra.mxu0 0
    %145 = vmatprep.subr.bf16.mxu0 0
    %146 = vmatpush1.bf16.msra.mxu0 0
    %147 = vmatprep.subr.bf16.mxu0 0
    %148 = vmatpush1.bf16.msra.mxu0 0
    %149 = vmatprep.subr.bf16.mxu0 0
    %150 = vmatpush1.bf16.msra.mxu0 0
    %151 = vmatprep.subr.bf16.mxu0 0
    %152 = vmatpush1.bf16.msra.mxu0 0
    %153 = vmatprep.subr.bf16.mxu0 0
    %154 = vmatpush1.bf16.msra.mxu0 0
    %155 = vmatprep.mubr.bf16.mxu0 0
    %156 = vmatmul.mubr.bf16.gmra.mrb[0].mxu0 %v53
    %v157 = vpop.f32.mrb[0].mxu0
    %v158 = vadd.f32 %v74, %v157
    %v159 = vpop.f32.mrb[0].mxu0
    %v160 = vpop.f32.mrb[0].mxu0
    %v161 = vpop.f32.mrb[0].mxu0
    %162 = vdwg.mxu0
    %vm163 = vcmp.gt.f32.partialorder %v158, 0.0
    %v164 = vmul.f32 %v158, 1.442695
    %v165 = vpow.pop %v164
    %v166 = vsub.f32 %v165, 1.0
    %v167 = vsel %vm163, %v158, %v166
    %v168 = vpack.c.bf16 %v167, %v167
    %v169 = vld [vmem:[#allocation5 + $0x40] sm:$0xf]
    %v170 = vld [vmem:[#allocation5 + $0x44] sm:$0xf]
    %v171 = vld [vmem:[#allocation5 + $0x48] sm:$0xf]
    %v172 = vld [vmem:[#allocation5 + $0x4c] sm:$0xf]
    %v173 = vld [vmem:[#allocation5 + $0x50] sm:$0xf]
    %v174 = vld [vmem:[#allocation5 + $0x54] sm:$0xf]
    %v175 = vld [vmem:[#allocation5 + $0x58] sm:$0xf]
    %v176 = vld [vmem:[#allocation5 + $0x5c] sm:$0xf]
    %v177 = vld [vmem:[#allocation5 + $0x60] sm:$0xf]
    %v178 = vld [vmem:[#allocation5 + $0x64] sm:$0xf]
    %v179 = vld [vmem:[#allocation5 + $0x68] sm:$0xf]
    %v180 = vld [vmem:[#allocation5 + $0x6c] sm:$0xf]
    %v181 = vld [vmem:[#allocation5 + $0x70] sm:$0xf]
    %v182 = vld [vmem:[#allocation5 + $0x74] sm:$0xf]
    %v183 = vld [vmem:[#allocation5 + $0x78] sm:$0xf]
    %v184 = vld [vmem:[#allocation5 + $0x7c] sm:$0xf]
    %v185 = vld [vmem:[#allocation7 + $0x1] sm:$0x1]
    %v186 = vlaneseq
    %v187 = vshrl.u32 %v186, 7
    %v188 = vsub.s32 0, %v187
    %v189 = vrot.slane %v185, %v188
    %v206 = vunpack.c.l.b16 %v169
    %v207 = vunpack.c.l.b16 %v170
    %v208 = vunpack.c.l.b16 %v171
    %v209 = vunpack.c.l.b16 %v172
    %v210 = vunpack.c.l.b16 %v173
    %v211 = vunpack.c.l.b16 %v174
    %v212 = vunpack.c.l.b16 %v175
    %v213 = vunpack.c.l.b16 %v176
    %v214 = vunpack.c.l.b16 %v177
    %v215 = vunpack.c.l.b16 %v178
    %v216 = vunpack.c.l.b16 %v179
    %v217 = vunpack.c.l.b16 %v180
    %v218 = vunpack.c.l.b16 %v181
    %v219 = vunpack.c.l.b16 %v182
    %v220 = vunpack.c.l.b16 %v183
    %v221 = vunpack.c.l.b16 %v184
    %v222 = vpack.c.b16 %v207, %v206
    %v223 = vpack.c.b16 %v209, %v208
    %v224 = vpack.c.b16 %v211, %v210
    %v225 = vpack.c.b16 %v213, %v212
    %v226 = vpack.c.b16 %v215, %v214
    %v227 = vpack.c.b16 %v217, %v216
    %v228 = vpack.c.b16 %v219, %v218
    %v229 = vpack.c.b16 %v221, %v220
    %238 = vmatprep.subr.bf16.mxu0 0
    %239 = vmatpush1.bf16.msra.mxu0 %v222
    %240 = vmatprep.subr.bf16.mxu0 0
    %241 = vmatpush1.bf16.msra.mxu0 %v223
    %242 = vmatprep.subr.bf16.mxu0 0
    %243 = vmatpush1.bf16.msra.mxu0 %v224
    %244 = vmatprep.subr.bf16.mxu0 0
    %245 = vmatpush1.bf16.msra.mxu0 %v225
    %246 = vmatprep.subr.bf16.mxu0 0
    %247 = vmatpush1.bf16.msra.mxu0 %v226
    %248 = vmatprep.subr.bf16.mxu0 0
    %249 = vmatpush1.bf16.msra.mxu0 %v227
    %250 = vmatprep.subr.bf16.mxu0 0
    %251 = vmatpush1.bf16.msra.mxu0 %v228
    %252 = vmatprep.subr.bf16.mxu0 0
    %253 = vmatpush1.bf16.msra.mxu0 %v229
    %254 = vmatprep.subr.bf16.mxu0 0
    %255 = vmatpush1.bf16.msra.mxu0 0
    %256 = vmatprep.subr.bf16.mxu0 0
    %257 = vmatpush1.bf16.msra.mxu0 0
    %258 = vmatprep.subr.bf16.mxu0 0
    %259 = vmatpush1.bf16.msra.mxu0 0
    %260 = vmatprep.subr.bf16.mxu0 0
    %261 = vmatpush1.bf16.msra.mxu0 0
    %262 = vmatprep.subr.bf16.mxu0 0
    %263 = vmatpush1.bf16.msra.mxu0 0
    %264 = vmatprep.subr.bf16.mxu0 0
    %265 = vmatpush1.bf16.msra.mxu0 0
    %266 = vmatprep.subr.bf16.mxu0 0
    %267 = vmatpush1.bf16.msra.mxu0 0
    %268 = vmatprep.subr.bf16.mxu0 0
    %269 = vmatpush1.bf16.msra.mxu0 0
    %270 = vmatprep.mubr.bf16.mxu0 0
    %271 = vmatmul.mubr.bf16.gmra.mrb[0].mxu0 %v168
    %v272 = vpop.f32.mrb[0].mxu0
    %v273 = vadd.f32 %v189, %v272
    %v274 = vpop.f32.mrb[0].mxu0
    %v275 = vpop.f32.mrb[0].mxu0
    %v276 = vpop.f32.mrb[0].mxu0
    %277 = vdwg.mxu0
    %vm278 = vcmp.gt.f32.partialorder %v273, 0.0
    %v279 = vmul.f32 %v273, 1.442695
    %v280 = vpow.pop %v279
    %v281 = vsub.f32 %v280, 1.0
    %v282 = vsel %vm278, %v273, %v281
    %v283 = vpack.c.bf16 %v282, %v282
    %v284 = vld [vmem:[#allocation5 + $0x80] sm:$0xf]
    %v285 = vld [vmem:[#allocation5 + $0x84] sm:$0xf]
    %v286 = vld [vmem:[#allocation5 + $0x88] sm:$0xf]
    %v287 = vld [vmem:[#allocation5 + $0x8c] sm:$0xf]
    %v288 = vld [vmem:[#allocation5 + $0x90] sm:$0xf]
    %v289 = vld [vmem:[#allocation5 + $0x94] sm:$0xf]
    %v290 = vld [vmem:[#allocation5 + $0x98] sm:$0xf]
    %v291 = vld [vmem:[#allocation5 + $0x9c] sm:$0xf]
    %v292 = vld [vmem:[#allocation5 + $0xa0] sm:$0xf]
    %v293 = vld [vmem:[#allocation5 + $0xa4] sm:$0xf]
    %v294 = vld [vmem:[#allocation5 + $0xa8] sm:$0xf]
    %v295 = vld [vmem:[#allocation5 + $0xac] sm:$0xf]
    %v296 = vld [vmem:[#allocation5 + $0xb0] sm:$0xf]
    %v297 = vld [vmem:[#allocation5 + $0xb4] sm:$0xf]
    %v298 = vld [vmem:[#allocation5 + $0xb8] sm:$0xf]
    %v299 = vld [vmem:[#allocation5 + $0xbc] sm:$0xf]
    %v300 = vld [vmem:[#allocation7 + $0x2] sm:$0x1]
    %v301 = vlaneseq
    %v302 = vshrl.u32 %v301, 7
    %v303 = vsub.s32 0, %v302
    %v304 = vrot.slane %v300, %v303
    %v321 = vunpack.c.l.b16 %v284
    %v322 = vunpack.c.l.b16 %v285
    %v323 = vunpack.c.l.b16 %v286
    %v324 = vunpack.c.l.b16 %v287
    %v325 = vunpack.c.l.b16 %v288
    %v326 = vunpack.c.l.b16 %v289
    %v327 = vunpack.c.l.b16 %v290
    %v328 = vunpack.c.l.b16 %v291
    %v329 = vunpack.c.l.b16 %v292
    %v330 = vunpack.c.l.b16 %v293
    %v331 = vunpack.c.l.b16 %v294
    %v332 = vunpack.c.l.b16 %v295
    %v333 = vunpack.c.l.b16 %v296
    %v334 = vunpack.c.l.b16 %v297
    %v335 = vunpack.c.l.b16 %v298
    %v336 = vunpack.c.l.b16 %v299
    %v337 = vpack.c.b16 %v322, %v321
    %v338 = vpack.c.b16 %v324, %v323
    %v339 = vpack.c.b16 %v326, %v325
    %v340 = vpack.c.b16 %v328, %v327
    %v341 = vpack.c.b16 %v330, %v329
    %v342 = vpack.c.b16 %v332, %v331
    %v343 = vpack.c.b16 %v334, %v333
    %v344 = vpack.c.b16 %v336, %v335
    %353 = vmatprep.subr.bf16.mxu0 0
    %354 = vmatpush1.bf16.msra.mxu0 %v337
    %355 = vmatprep.subr.bf16.mxu0 0
    %356 = vmatpush1.bf16.msra.mxu0 %v338
    %357 = vmatprep.subr.bf16.mxu0 0
    %358 = vmatpush1.bf16.msra.mxu0 %v339
    %359 = vmatprep.subr.bf16.mxu0 0
    %360 = vmatpush1.bf16.msra.mxu0 %v340
    %361 = vmatprep.subr.bf16.mxu0 0
    %362 = vmatpush1.bf16.msra.mxu0 %v341
    %363 = vmatprep.subr.bf16.mxu0 0
    %364 = vmatpush1.bf16.msra.mxu0 %v342
    %365 = vmatprep.subr.bf16.mxu0 0
    %366 = vmatpush1.bf16.msra.mxu0 %v343
    %367 = vmatprep.subr.bf16.mxu0 0
    %368 = vmatpush1.bf16.msra.mxu0 %v344
    %369 = vmatprep.subr.bf16.mxu0 0
    %370 = vmatpush1.bf16.msra.mxu0 0
    %371 = vmatprep.subr.bf16.mxu0 0
    %372 = vmatpush1.bf16.msra.mxu0 0
    %373 = vmatprep.subr.bf16.mxu0 0
    %374 = vmatpush1.bf16.msra.mxu0 0
    %375 = vmatprep.subr.bf16.mxu0 0
    %376 = vmatpush1.bf16.msra.mxu0 0
    %377 = vmatprep.subr.bf16.mxu0 0
    %378 = vmatpush1.bf16.msra.mxu0 0
    %379 = vmatprep.subr.bf16.mxu0 0
    %380 = vmatpush1.bf16.msra.mxu0 0
    %381 = vmatprep.subr.bf16.mxu0 0
    %382 = vmatpush1.bf16.msra.mxu0 0
    %383 = vmatprep.subr.bf16.mxu0 0
    %384 = vmatpush1.bf16.msra.mxu0 0
    %385 = vmatprep.mubr.bf16.mxu0 0
    %386 = vmatmul.mubr.bf16.gmra.mrb[0].mxu0 %v283
    %v387 = vpop.f32.mrb[0].mxu0
    %v388 = vadd.f32 %v304, %v387
    %v389 = vpop.f32.mrb[0].mxu0
    %v390 = vpop.f32.mrb[0].mxu0
    %v391 = vpop.f32.mrb[0].mxu0
    %392 = vdwg.mxu0
    %vm393 = vcmp.gt.f32.partialorder %v388, 0.0
    %v394 = vmul.f32 %v388, 1.442695
    %v395 = vpow.pop %v394
    %v396 = vsub.f32 %v395, 1.0
    %v397 = vsel %vm393, %v388, %v396
    %v398 = vpack.c.bf16 %v397, %v397
    %v399 = vld [vmem:[#allocation5 + $0xc0] sm:$0xf]
    %v400 = vld [vmem:[#allocation5 + $0xc4] sm:$0xf]
    %v401 = vld [vmem:[#allocation5 + $0xc8] sm:$0xf]
    %v402 = vld [vmem:[#allocation5 + $0xcc] sm:$0xf]
    %v403 = vld [vmem:[#allocation5 + $0xd0] sm:$0xf]
    %v404 = vld [vmem:[#allocation5 + $0xd4] sm:$0xf]
    %v405 = vld [vmem:[#allocation5 + $0xd8] sm:$0xf]
    %v406 = vld [vmem:[#allocation5 + $0xdc] sm:$0xf]
    %v407 = vld [vmem:[#allocation5 + $0xe0] sm:$0xf]
    %v408 = vld [vmem:[#allocation5 + $0xe4] sm:$0xf]
    %v409 = vld [vmem:[#allocation5 + $0xe8] sm:$0xf]
    %v410 = vld [vmem:[#allocation5 + $0xec] sm:$0xf]
    %v411 = vld [vmem:[#allocation5 + $0xf0] sm:$0xf]
    %v412 = vld [vmem:[#allocation5 + $0xf4] sm:$0xf]
    %v413 = vld [vmem:[#allocation5 + $0xf8] sm:$0xf]
    %v414 = vld [vmem:[#allocation5 + $0xfc] sm:$0xf]
    %v415 = vld [vmem:[#allocation7 + $0x3] sm:$0x1]
    %v416 = vlaneseq
    %v417 = vshrl.u32 %v416, 7
    %v418 = vsub.s32 0, %v417
    %v419 = vrot.slane %v415, %v418
    %v436 = vunpack.c.l.b16 %v399
    %v437 = vunpack.c.l.b16 %v400
    %v438 = vunpack.c.l.b16 %v401
    %v439 = vunpack.c.l.b16 %v402
    %v440 = vunpack.c.l.b16 %v403
    %v441 = vunpack.c.l.b16 %v404
    %v442 = vunpack.c.l.b16 %v405
    %v443 = vunpack.c.l.b16 %v406
    %v444 = vunpack.c.l.b16 %v407
    %v445 = vunpack.c.l.b16 %v408
    %v446 = vunpack.c.l.b16 %v409
    %v447 = vunpack.c.l.b16 %v410
    %v448 = vunpack.c.l.b16 %v411
    %v449 = vunpack.c.l.b16 %v412
    %v450 = vunpack.c.l.b16 %v413
    %v451 = vunpack.c.l.b16 %v414
    %v452 = vpack.c.b16 %v437, %v436
    %v453 = vpack.c.b16 %v439, %v438
    %v454 = vpack.c.b16 %v441, %v440
    %v455 = vpack.c.b16 %v443, %v442
    %v456 = vpack.c.b16 %v445, %v444
    %v457 = vpack.c.b16 %v447, %v446
    %v458 = vpack.c.b16 %v449, %v448
    %v459 = vpack.c.b16 %v451, %v450
    %468 = vmatprep.subr.bf16.mxu0 0
    %469 = vmatpush1.bf16.msra.mxu0 %v452
    %470 = vmatprep.subr.bf16.mxu0 0
    %471 = vmatpush1.bf16.msra.mxu0 %v453
    %472 = vmatprep.subr.bf16.mxu0 0
    %473 = vmatpush1.bf16.msra.mxu0 %v454
    %474 = vmatprep.subr.bf16.mxu0 0
    %475 = vmatpush1.bf16.msra.mxu0 %v455
    %476 = vmatprep.subr.bf16.mxu0 0
    %477 = vmatpush1.bf16.msra.mxu0 %v456
    %478 = vmatprep.subr.bf16.mxu0 0
    %479 = vmatpush1.bf16.msra.mxu0 %v457
    %480 = vmatprep.subr.bf16.mxu0 0
    %481 = vmatpush1.bf16.msra.mxu0 %v458
    %482 = vmatprep.subr.bf16.mxu0 0
    %483 = vmatpush1.bf16.msra.mxu0 %v459
    %484 = vmatprep.subr.bf16.mxu0 0
    %485 = vmatpush1.bf16.msra.mxu0 0
    %486 = vmatprep.subr.bf16.mxu0 0
    %487 = vmatpush1.bf16.msra.mxu0 0
    %488 = vmatprep.subr.bf16.mxu0 0
    %489 = vmatpush1.bf16.msra.mxu0 0
    %490 = vmatprep.subr.bf16.mxu0 0
    %491 = vmatpush1.bf16.msra.mxu0 0
    %492 = vmatprep.subr.bf16.mxu0 0
    %493 = vmatpush1.bf16.msra.mxu0 0
    %494 = vmatprep.subr.bf16.mxu0 0
    %495 = vmatpush1.bf16.msra.mxu0 0
    %496 = vmatprep.subr.bf16.mxu0 0
    %497 = vmatpush1.bf16.msra.mxu0 0
    %498 = vmatprep.subr.bf16.mxu0 0
    %499 = vmatpush1.bf16.msra.mxu0 0
    %500 = vmatprep.mubr.bf16.mxu0 0
    %501 = vmatmul.mubr.bf16.gmra.mrb[0].mxu0 %v398
    %v502 = vpop.f32.mrb[0].mxu0
    %v503 = vadd.f32 %v419, %v502
    %v504 = vpop.f32.mrb[0].mxu0
    %v505 = vpop.f32.mrb[0].mxu0
    %v506 = vpop.f32.mrb[0].mxu0
    %507 = vdwg.mxu0
    %508 = vst [vmem:[#allocation8] sm:$0xff] %v503
    // Predicated region
    $region26: #{tpu_custom_call.1} parent=1 // pred_check
      _
    $region27: #{tpu_custom_call.1} parent=1 // pred_check_branch
      %510 = sbr.rel (0) target = $region29
    $region28: #{tpu_custom_call.1} parent=1 // pred_region
      %s512 = ssub.s32 128, 128
      %513 = vsyncadd [#allocation4], %s512
      %s515 = sshll.u32 [#allocation8], 4
      %s516 = int_to_ptr.vmem [resolvable:$true] %s515
      %518 = dma.vmem_to_hbm [thread:$0]  %s516, 128, %s3, [#allocation4]
    $region29: #{tpu_custom_call.1} parent=1 // pred_fallthru
      _
    // Predicated region
    $region30: #{tpu_custom_call.1} parent=1 // pred_check
      _
    $region31: #{tpu_custom_call.1} parent=1 // pred_check_branch
      %520 = sbr.rel (0) target = $region33
    $region32: #{tpu_custom_call.1} parent=1 // pred_region
      %521 = dma.done [#allocation4], 128
    $region33: #{tpu_custom_call.1} parent=1 // pred_fallthru
      _
    %522 = vsyncpa [#allocation3], 1
    %523 = vsyncpa [#allocation6], 1
    %524 = vsyncpa [#allocation4], 1

</llo_original>
